<compile_context>
chip_gen: v5e
topology: v5e:2x2
jax: 0.10.0
libtpu: 0.0.40
codegen_flags: <defaults>
</compile_context>

<pallas_src>
import jax
import jax.numpy as jnp
from jax import lax
from jax.experimental import pallas as pl
from jax.experimental.pallas import tpu as pltpu

EPS = 0.001
INV_EPS = 1.0 / EPS
MAX_ITER = 100
THRESH = 1e-1
K_UNROLL = 10                     # convergence check amortized over K updates
N_BLOCKS = MAX_ITER // K_UNROLL   # 10 outer while iterations -> <= 100 Sinkhorn updates


def _make_sinkhorn_kernel(n_half, d, emit_plan):
    n = m = n_half

    def kernel(psi_ref, *out_refs):
        if emit_plan:
            cost_ref, pi_ref, c_ref = out_refs
        else:
            (cost_ref,) = out_refs

        # sepr_repr: split the batch into two equal halves inside the kernel.
        x = psi_ref[...].astype(jnp.float32)      # (2n, d) -- keep fp32 for the whole loop
        a = x[:n]                                 # psi0  (n, d)
        b = x[n:2 * n]                            # psi1  (m, d)

        # ---- Cost matrix on the MXU: C[i,j] = ||a_i - b_j||^2 (one-shot prologue) -------
        ab = lax.dot_general(a, b, (((1,), (1,)), ((), ())),
                             preferred_element_type=jnp.float32)          # (n, m)
        a_sq = jnp.sum(a * a, axis=1, keepdims=True)                      # (n, 1)
        b_sq = lax.dot_general(jnp.ones((1, d), jnp.float32), b * b,
                               (((1,), (1,)), ((), ())),
                               preferred_element_type=jnp.float32)        # (1, m)
        # NOTE: MXU cancellation + clamp differs from elementwise |a-b|^2 at the ULP level;
        # with eps=1e-3 the plan is sharp so near-ties in pi may flip (tolerance documented).
        C = jnp.maximum(a_sq + b_sq - 2.0 * ab, 0.0)

        log_mu = jnp.log(jnp.float32(1.0 / n) + 1e-8)     # uniform marginals (reference)
        log_nu = jnp.log(jnp.float32(1.0 / m) + 1e-8)

        def lse_rows(Mk):                                 # logsumexp over axis -1 -> (n, 1)
            mx = jnp.max(Mk, axis=-1, keepdims=True)
            return mx + jnp.log(jnp.sum(jnp.exp(Mk - mx), axis=-1, keepdims=True))

        def lse_cols(Mk):                                 # logsumexp over axis 0 -> (1, m)
            # NOTE: at large n route this through the MXU (ones(1,n) @ exp(Mk - mx));
            # at n=8 the XLU sublane reduce is fine.
            mx = jnp.max(Mk, axis=0, keepdims=True)
            return mx + jnp.log(jnp.sum(jnp.exp(Mk - mx), axis=0, keepdims=True))

        def cond(state):
            blk, _, _, _, err = state
            return jnp.logical_and(blk < N_BLOCKS, err >= THRESH)

        def body(state):
            blk, u, v, _, _ = state
            # Rebuild the scaled log-kernel once per block (bounds fp32 delta drift);
            # inside the block it is carried and updated purely by deltas.
            Mk = (-C + u + v) * INV_EPS
            du_s = jnp.zeros((n, 1), jnp.float32)
            for _ in range(K_UNROLL):
                du_s = log_mu - lse_rows(Mk)              # (u_new - u) / eps
                Mk = Mk + du_s                            # M(u_new, v)   (row broadcast)
                u = u + EPS * du_s                        # off the critical path
                dv_s = log_nu - lse_cols(Mk)              # (v_new - v) / eps
                Mk = Mk + dv_s                            # M(u_new, v_new)
                v = v + EPS * dv_s
            # reference: err = (u - u1).abs().sum(-1).mean(); batch == 1 -> plain sum
            err = EPS * jnp.sum(jnp.abs(du_s))
            return (blk + 1, u, v, Mk, err)

        state0 = (jnp.array(0, jnp.int32),
                  jnp.zeros((n, 1), jnp.float32),
                  jnp.zeros((1, m), jnp.float32),
                  jnp.zeros((n, m), jnp.float32),
                  jnp.array(jnp.inf, jnp.float32))
        _, _, _, Mk, _ = lax.while_loop(cond, body, state0)

        pi = jnp.exp(Mk)                                  # reuse carried M(u, v)
        cost_ref[...] = jnp.reshape(jnp.sum(pi * C), (1, 1))   # reduction=None -> raw scalar
        if emit_plan:
            pi_ref[...] = pi
            c_ref[...] = C

    return kernel


def wass_loss(psi, return_plan=True):
    """psi: (N, D) float32 representation.

    return_plan=True  -> (cost, pi, C), matching SinkhornDistance(reduction=None).
    return_plan=False -> cost only (drops the pi/C HBM writebacks).
    """
    N, d = psi.shape
    n_half = N // 2
    n = m = n_half
    # TODO(synk): swap in the real sepr_repr if its definition differs (odd-N handling:
    # the trailing row is dropped here, matching psi[n_half:2*n_half]).
    if N % 2:
        psi = psi[:2 * n_half]

    kernel = _make_sinkhorn_kernel(n_half, d, return_plan)

    cost_shape = jax.ShapeDtypeStruct((1, 1), jnp.float32)
    cost_spec = pl.BlockSpec((1, 1), lambda i: (0, 0))
    plan_shape = jax.ShapeDtypeStruct((n, m), jnp.float32)
    plan_spec = pl.BlockSpec((n, m), lambda i: (0, 0))

    if return_plan:
        out_shape = (cost_shape, plan_shape, plan_shape)
        out_specs = (cost_spec, plan_spec, plan_spec)
    else:
        out_shape = cost_shape
        out_specs = cost_spec

    # NOTE(perf): one WassLoss call is a single tiny, latency-bound Sinkhorn problem
    # (~6% lane occupancy). If the workload has many independent problems, pack them
    # into the lane dimension / a leading "parallel" grid axis rather than calling this
    # per problem. For large n*m the full-residency design needs a streaming-LSE
    # reformulation (not just a BlockSpec grid) and a per-generation VMEM budget
    # (~4-5 live (n,m) f32 tiles; 64 MiB physical VMEM on v7x vs 128 MiB on v5e/v6e).
    outs = pl.pallas_call(
        kernel,
        out_shape=out_shape,
        grid=(1,),
        in_specs=[pl.BlockSpec((2 * n_half, d), lambda i: (0, 0))],   # whole psi, one DMA;
                                                                      # halves sliced in-kernel
        out_specs=out_specs,
        compiler_params=pltpu.CompilerParams(dimension_semantics=("arbitrary",)),
    )(psi)

    if return_plan:
        cost, pi, C = outs
        return cost[0, 0], pi, C
    return outs[0, 0]


if __name__ == "__main__":
    key = jax.random.PRNGKey(0)
    # Small representation: batch N=16 (split into two halves of 8), hidden D=32.
    psi = jax.random.normal(key, (16, 32), dtype=jnp.float32)

    cost, pi, C = wass_loss(psi)
    jax.block_until_ready((cost, pi, C))

    assert cost.shape == ()
    assert pi.shape == (8, 8) and C.shape == (8, 8)
    assert bool(jnp.isfinite(cost))

    # cost-only fast path (no pi/C writebacks)
    cost_only = wass_loss(psi, return_plan=False)
    jax.block_until_ready(cost_only)
    assert bool(jnp.isfinite(cost_only))

    print("KERNEL_OK")
</pallas_src>

<mosaic_0001>
module attributes {stable_mosaic.version = 11 : i64} {
  func.func @kernel(%arg0: i32, %arg1: memref<16x32xf32, #tpu.memory_space<vmem>>, %arg2: memref<1x1xf32, #tpu.memory_space<vmem>>, %arg3: memref<8x8xf32, #tpu.memory_space<vmem>>, %arg4: memref<8x8xf32, #tpu.memory_space<vmem>>) attributes {dimension_semantics = [#tpu.dimension_semantics<arbitrary>], iteration_bounds = array<i64: 1>, scalar_prefetch = 0 : i64, scratch_operands = 0 : i64, tpu.core_type = #tpu.core_type<tc>, window_params = [{pipeline_mode = #tpu.pipeline_mode<synchronous>, transform_indices = @transform_0, window_bounds = array<i64: 16, 32>}, {pipeline_mode = #tpu.pipeline_mode<synchronous>, transform_indices = @transform_1, window_bounds = array<i64: 1, 1>}, {pipeline_mode = #tpu.pipeline_mode<synchronous>, transform_indices = @transform_2, window_bounds = array<i64: 8, 8>}, {pipeline_mode = #tpu.pipeline_mode<synchronous>, transform_indices = @transform_3, window_bounds = array<i64: 8, 8>}]} {
    %c0 = arith.constant 0 : index
    %c0_0 = arith.constant 0 : index
    %0 = vector.load %arg1[%c0, %c0_0] : memref<16x32xf32, #tpu.memory_space<vmem>>, vector<16x32xf32>
    %1 = vector.extract_strided_slice %0 {offsets = [0, 0], sizes = [8, 32], strides = [1, 1]} : vector<16x32xf32> to vector<8x32xf32>
    %2 = vector.extract_strided_slice %0 {offsets = [8, 0], sizes = [8, 32], strides = [1, 1]} : vector<16x32xf32> to vector<8x32xf32>
    %cst = arith.constant dense<0.000000e+00> : vector<8x8xf32>
    %3 = tpu.matmul %1, %2, %cst {dimension_numbers = #tpu.dot_dimension_numbers<[1], [1], [0], [0], [0, 0, 1, 0], [], []>} : vector<8x32xf32>, vector<8x32xf32>, vector<8x8xf32> -> vector<8x8xf32>
    %4 = arith.mulf %1, %1 : vector<8x32xf32>
    %cst_1 = arith.constant dense<0.000000e+00> : vector<8xf32>
    %5 = vector.multi_reduction <add>, %4, %cst_1 [1] : vector<8x32xf32> to vector<8xf32>
    %6 = vector.shape_cast %5 : vector<8xf32> to vector<8x1xf32>
    %cst_2 = arith.constant 1.000000e+00 : f32
    %7 = vector.broadcast %cst_2 : f32 to vector<1x32xf32>
    %8 = arith.mulf %2, %2 : vector<8x32xf32>
    %cst_3 = arith.constant dense<0.000000e+00> : vector<1x8xf32>
    %9 = tpu.matmul %7, %8, %cst_3 {dimension_numbers = #tpu.dot_dimension_numbers<[1], [1], [0], [0], [0, 0, 1, 0], [], []>} : vector<1x32xf32>, vector<8x32xf32>, vector<1x8xf32> -> vector<1x8xf32>
    %10 = vector.broadcast %6 : vector<8x1xf32> to vector<8x8xf32>
    %11 = vector.broadcast %9 : vector<1x8xf32> to vector<8x8xf32>
    %12 = arith.addf %10, %11 : vector<8x8xf32>
    %cst_4 = arith.constant 2.000000e+00 : f32
    %13 = vector.broadcast %cst_4 : f32 to vector<8x8xf32>
    %14 = arith.mulf %13, %3 : vector<8x8xf32>
    %15 = arith.subf %12, %14 : vector<8x8xf32>
    %cst_5 = arith.constant 0.000000e+00 : f32
    %16 = vector.broadcast %cst_5 : f32 to vector<8x8xf32>
    %17 = arith.maximumf %15, %16 : vector<8x8xf32>
    %cst_6 = arith.constant 1.250000e-01 : f32
    %cst_7 = arith.constant 9.99999993E-9 : f32
    %18 = arith.addf %cst_6, %cst_7 : f32
    %19 = math.log %18 : f32
    %cst_8 = arith.constant 1.250000e-01 : f32
    %cst_9 = arith.constant 9.99999993E-9 : f32
    %20 = arith.addf %cst_8, %cst_9 : f32
    %21 = math.log %20 : f32
    %cst_10 = arith.constant 0.000000e+00 : f32
    %22 = vector.broadcast %cst_10 : f32 to vector<8x1xf32>
    %cst_11 = arith.constant 0.000000e+00 : f32
    %23 = vector.broadcast %cst_11 : f32 to vector<1x8xf32>
    %cst_12 = arith.constant 0.000000e+00 : f32
    %24 = vector.broadcast %cst_12 : f32 to vector<8x8xf32>
    %c0_i32 = arith.constant 0 : i32
    %cst_13 = arith.constant 0x7F800000 : f32
    %25:5 = scf.while (%arg5 = %c0_i32, %arg6 = %22, %arg7 = %23, %arg8 = %24, %arg9 = %cst_13) : (i32, vector<8x1xf32>, vector<1x8xf32>, vector<8x8xf32>, f32) -> (i32, vector<8x1xf32>, vector<1x8xf32>, vector<8x8xf32>, f32) {
      %c10_i32 = arith.constant 10 : i32
      %36 = arith.cmpi slt, %arg5, %c10_i32 : i32
      %cst_21 = arith.constant 1.000000e-01 : f32
      %37 = arith.cmpf oge, %arg9, %cst_21 : f32
      %38 = arith.andi %36, %37 : i1
      scf.condition(%38) %arg5, %arg6, %arg7, %arg8, %arg9 : i32, vector<8x1xf32>, vector<1x8xf32>, vector<8x8xf32>, f32
    } do {
    ^bb0(%arg5: i32, %arg6: vector<8x1xf32>, %arg7: vector<1x8xf32>, %arg8: vector<8x8xf32>, %arg9: f32):
      %cst_21 = arith.constant 0.000000e+00 : f32
      %36 = vector.broadcast %cst_21 : f32 to vector<8x8xf32>
      %37 = arith.subf %36, %17 : vector<8x8xf32>
      %38 = vector.broadcast %arg6 : vector<8x1xf32> to vector<8x8xf32>
      %39 = arith.addf %37, %38 : vector<8x8xf32>
      %40 = vector.broadcast %arg7 : vector<1x8xf32> to vector<8x8xf32>
      %41 = arith.addf %39, %40 : vector<8x8xf32>
      %cst_22 = arith.constant 1.000000e+03 : f32
      %42 = vector.broadcast %cst_22 : f32 to vector<8x8xf32>
      %43 = arith.mulf %41, %42 : vector<8x8xf32>
      %cst_23 = arith.constant 0.000000e+00 : f32
      %44 = vector.broadcast %cst_23 : f32 to vector<8x1xf32>
      %cst_24 = arith.constant dense<0xFF800000> : vector<8xf32>
      %45 = vector.multi_reduction <maximumf>, %43, %cst_24 [1] : vector<8x8xf32> to vector<8xf32>
      %46 = vector.shape_cast %45 : vector<8xf32> to vector<8x1xf32>
      %47 = vector.broadcast %46 : vector<8x1xf32> to vector<8x8xf32>
      %48 = arith.subf %43, %47 : vector<8x8xf32>
      %49 = math.exp %48 : vector<8x8xf32>
      %cst_25 = arith.constant dense<0.000000e+00> : vector<8xf32>
      %50 = vector.multi_reduction <add>, %49, %cst_25 [1] : vector<8x8xf32> to vector<8xf32>
      %51 = vector.shape_cast %50 : vector<8xf32> to vector<8x1xf32>
      %52 = math.log %51 : vector<8x1xf32>
      %53 = arith.addf %46, %52 : vector<8x1xf32>
      %54 = vector.broadcast %19 : f32 to vector<8x1xf32>
      %55 = arith.subf %54, %53 : vector<8x1xf32>
      %56 = vector.broadcast %55 : vector<8x1xf32> to vector<8x8xf32>
      %57 = arith.addf %43, %56 : vector<8x8xf32>
      %cst_26 = arith.constant 1.000000e-03 : f32
      %58 = vector.broadcast %cst_26 : f32 to vector<8x1xf32>
      %59 = arith.mulf %58, %55 : vector<8x1xf32>
      %60 = arith.addf %arg6, %59 : vector<8x1xf32>
      %cst_27 = arith.constant dense<0xFF800000> : vector<8xf32>
      %61 = vector.multi_reduction <maximumf>, %57, %cst_27 [0] : vector<8x8xf32> to vector<8xf32>
      %62 = vector.shape_cast %61 : vector<8xf32> to vector<1x8xf32>
      %63 = vector.broadcast %62 : vector<1x8xf32> to vector<8x8xf32>
      %64 = arith.subf %57, %63 : vector<8x8xf32>
      %65 = math.exp %64 : vector<8x8xf32>
      %cst_28 = arith.constant dense<0.000000e+00> : vector<8xf32>
      %66 = vector.multi_reduction <add>, %65, %cst_28 [0] : vector<8x8xf32> to vector<8xf32>
      %67 = vector.shape_cast %66 : vector<8xf32> to vector<1x8xf32>
      %68 = math.log %67 : vector<1x8xf32>
      %69 = arith.addf %62, %68 : vector<1x8xf32>
      %70 = vector.broadcast %21 : f32 to vector<1x8xf32>
      %71 = arith.subf %70, %69 : vector<1x8xf32>
      %72 = vector.broadcast %71 : vector<1x8xf32> to vector<8x8xf32>
      %73 = arith.addf %57, %72 : vector<8x8xf32>
      %cst_29 = arith.constant 1.000000e-03 : f32
      %74 = vector.broadcast %cst_29 : f32 to vector<1x8xf32>
      %75 = arith.mulf %74, %71 : vector<1x8xf32>
      %76 = arith.addf %arg7, %75 : vector<1x8xf32>
      %cst_30 = arith.constant dense<0xFF800000> : vector<8xf32>
      %77 = vector.multi_reduction <maximumf>, %73, %cst_30 [1] : vector<8x8xf32> to vector<8xf32>
      %78 = vector.shape_cast %77 : vector<8xf32> to vector<8x1xf32>
      %79 = vector.broadcast %78 : vector<8x1xf32> to vector<8x8xf32>
      %80 = arith.subf %73, %79 : vector<8x8xf32>
      %81 = math.exp %80 : vector<8x8xf32>
      %cst_31 = arith.constant dense<0.000000e+00> : vector<8xf32>
      %82 = vector.multi_reduction <add>, %81, %cst_31 [1] : vector<8x8xf32> to vector<8xf32>
      %83 = vector.shape_cast %82 : vector<8xf32> to vector<8x1xf32>
      %84 = math.log %83 : vector<8x1xf32>
      %85 = arith.addf %78, %84 : vector<8x1xf32>
      %86 = vector.broadcast %19 : f32 to vector<8x1xf32>
      %87 = arith.subf %86, %85 : vector<8x1xf32>
      %88 = vector.broadcast %87 : vector<8x1xf32> to vector<8x8xf32>
      %89 = arith.addf %73, %88 : vector<8x8xf32>
      %cst_32 = arith.constant 1.000000e-03 : f32
      %90 = vector.broadcast %cst_32 : f32 to vector<8x1xf32>
      %91 = arith.mulf %90, %87 : vector<8x1xf32>
      %92 = arith.addf %60, %91 : vector<8x1xf32>
      %cst_33 = arith.constant dense<0xFF800000> : vector<8xf32>
      %93 = vector.multi_reduction <maximumf>, %89, %cst_33 [0] : vector<8x8xf32> to vector<8xf32>
      %94 = vector.shape_cast %93 : vector<8xf32> to vector<1x8xf32>
      %95 = vector.broadcast %94 : vector<1x8xf32> to vector<8x8xf32>
      %96 = arith.subf %89, %95 : vector<8x8xf32>
      %97 = math.exp %96 : vector<8x8xf32>
      %cst_34 = arith.constant dense<0.000000e+00> : vector<8xf32>
      %98 = vector.multi_reduction <add>, %97, %cst_34 [0] : vector<8x8xf32> to vector<8xf32>
      %99 = vector.shape_cast %98 : vector<8xf32> to vector<1x8xf32>
      %100 = math.log %99 : vector<1x8xf32>
      %101 = arith.addf %94, %100 : vector<1x8xf32>
      %102 = vector.broadcast %21 : f32 to vector<1x8xf32>
      %103 = arith.subf %102, %101 : vector<1x8xf32>
      %104 = vector.broadcast %103 : vector<1x8xf32> to vector<8x8xf32>
      %105 = arith.addf %89, %104 : vector<8x8xf32>
      %cst_35 = arith.constant 1.000000e-03 : f32
      %106 = vector.broadcast %cst_35 : f32 to vector<1x8xf32>
      %107 = arith.mulf %106, %103 : vector<1x8xf32>
      %108 = arith.addf %76, %107 : vector<1x8xf32>
      %cst_36 = arith.constant dense<0xFF800000> : vector<8xf32>
      %109 = vector.multi_reduction <maximumf>, %105, %cst_36 [1] : vector<8x8xf32> to vector<8xf32>
      %110 = vector.shape_cast %109 : vector<8xf32> to vector<8x1xf32>
      %111 = vector.broadcast %110 : vector<8x1xf32> to vector<8x8xf32>
      %112 = arith.subf %105, %111 : vector<8x8xf32>
      %113 = math.exp %112 : vector<8x8xf32>
      %cst_37 = arith.constant dense<0.000000e+00> : vector<8xf32>
      %114 = vector.multi_reduction <add>, %113, %cst_37 [1] : vector<8x8xf32> to vector<8xf32>
      %115 = vector.shape_cast %114 : vector<8xf32> to vector<8x1xf32>
      %116 = math.log %115 : vector<8x1xf32>
      %117 = arith.addf %110, %116 : vector<8x1xf32>
      %118 = vector.broadcast %19 : f32 to vector<8x1xf32>
      %119 = arith.subf %118, %117 : vector<8x1xf32>
      %120 = vector.broadcast %119 : vector<8x1xf32> to vector<8x8xf32>
      %121 = arith.addf %105, %120 : vector<8x8xf32>
      %cst_38 = arith.constant 1.000000e-03 : f32
      %122 = vector.broadcast %cst_38 : f32 to vector<8x1xf32>
      %123 = arith.mulf %122, %119 : vector<8x1xf32>
      %124 = arith.addf %92, %123 : vector<8x1xf32>
      %cst_39 = arith.constant dense<0xFF800000> : vector<8xf32>
      %125 = vector.multi_reduction <maximumf>, %121, %cst_39 [0] : vector<8x8xf32> to vector<8xf32>
      %126 = vector.shape_cast %125 : vector<8xf32> to vector<1x8xf32>
      %127 = vector.broadcast %126 : vector<1x8xf32> to vector<8x8xf32>
      %128 = arith.subf %121, %127 : vector<8x8xf32>
      %129 = math.exp %128 : vector<8x8xf32>
      %cst_40 = arith.constant dense<0.000000e+00> : vector<8xf32>
      %130 = vector.multi_reduction <add>, %129, %cst_40 [0] : vector<8x8xf32> to vector<8xf32>
      %131 = vector.shape_cast %130 : vector<8xf32> to vector<1x8xf32>
      %132 = math.log %131 : vector<1x8xf32>
      %133 = arith.addf %126, %132 : vector<1x8xf32>
      %134 = vector.broadcast %21 : f32 to vector<1x8xf32>
      %135 = arith.subf %134, %133 : vector<1x8xf32>
      %136 = vector.broadcast %135 : vector<1x8xf32> to vector<8x8xf32>
      %137 = arith.addf %121, %136 : vector<8x8xf32>
      %cst_41 = arith.constant 1.000000e-03 : f32
      %138 = vector.broadcast %cst_41 : f32 to vector<1x8xf32>
      %139 = arith.mulf %138, %135 : vector<1x8xf32>
      %140 = arith.addf %108, %139 : vector<1x8xf32>
      %cst_42 = arith.constant dense<0xFF800000> : vector<8xf32>
      %141 = vector.multi_reduction <maximumf>, %137, %cst_42 [1] : vector<8x8xf32> to vector<8xf32>
      %142 = vector.shape_cast %141 : vector<8xf32> to vector<8x1xf32>
      %143 = vector.broadcast %142 : vector<8x1xf32> to vector<8x8xf32>
      %144 = arith.subf %137, %143 : vector<8x8xf32>
      %145 = math.exp %144 : vector<8x8xf32>
      %cst_43 = arith.constant dense<0.000000e+00> : vector<8xf32>
      %146 = vector.multi_reduction <add>, %145, %cst_43 [1] : vector<8x8xf32> to vector<8xf32>
      %147 = vector.shape_cast %146 : vector<8xf32> to vector<8x1xf32>
      %148 = math.log %147 : vector<8x1xf32>
      %149 = arith.addf %142, %148 : vector<8x1xf32>
      %150 = vector.broadcast %19 : f32 to vector<8x1xf32>
      %151 = arith.subf %150, %149 : vector<8x1xf32>
      %152 = vector.broadcast %151 : vector<8x1xf32> to vector<8x8xf32>
      %153 = arith.addf %137, %152 : vector<8x8xf32>
      %cst_44 = arith.constant 1.000000e-03 : f32
      %154 = vector.broadcast %cst_44 : f32 to vector<8x1xf32>
      %155 = arith.mulf %154, %151 : vector<8x1xf32>
      %156 = arith.addf %124, %155 : vector<8x1xf32>
      %cst_45 = arith.constant dense<0xFF800000> : vector<8xf32>
      %157 = vector.multi_reduction <maximumf>, %153, %cst_45 [0] : vector<8x8xf32> to vector<8xf32>
      %158 = vector.shape_cast %157 : vector<8xf32> to vector<1x8xf32>
      %159 = vector.broadcast %158 : vector<1x8xf32> to vector<8x8xf32>
      %160 = arith.subf %153, %159 : vector<8x8xf32>
      %161 = math.exp %160 : vector<8x8xf32>
      %cst_46 = arith.constant dense<0.000000e+00> : vector<8xf32>
      %162 = vector.multi_reduction <add>, %161, %cst_46 [0] : vector<8x8xf32> to vector<8xf32>
      %163 = vector.shape_cast %162 : vector<8xf32> to vector<1x8xf32>
      %164 = math.log %163 : vector<1x8xf32>
      %165 = arith.addf %158, %164 : vector<1x8xf32>
      %166 = vector.broadcast %21 : f32 to vector<1x8xf32>
      %167 = arith.subf %166, %165 : vector<1x8xf32>
      %168 = vector.broadcast %167 : vector<1x8xf32> to vector<8x8xf32>
      %169 = arith.addf %153, %168 : vector<8x8xf32>
      %cst_47 = arith.constant 1.000000e-03 : f32
      %170 = vector.broadcast %cst_47 : f32 to vector<1x8xf32>
      %171 = arith.mulf %170, %167 : vector<1x8xf32>
      %172 = arith.addf %140, %171 : vector<1x8xf32>
      %cst_48 = arith.constant dense<0xFF800000> : vector<8xf32>
      %173 = vector.multi_reduction <maximumf>, %169, %cst_48 [1] : vector<8x8xf32> to vector<8xf32>
      %174 = vector.shape_cast %173 : vector<8xf32> to vector<8x1xf32>
      %175 = vector.broadcast %174 : vector<8x1xf32> to vector<8x8xf32>
      %176 = arith.subf %169, %175 : vector<8x8xf32>
      %177 = math.exp %176 : vector<8x8xf32>
      %cst_49 = arith.constant dense<0.000000e+00> : vector<8xf32>
      %178 = vector.multi_reduction <add>, %177, %cst_49 [1] : vector<8x8xf32> to vector<8xf32>
      %179 = vector.shape_cast %178 : vector<8xf32> to vector<8x1xf32>
      %180 = math.log %179 : vector<8x1xf32>
      %181 = arith.addf %174, %180 : vector<8x1xf32>
      %182 = vector.broadcast %19 : f32 to vector<8x1xf32>
      %183 = arith.subf %182, %181 : vector<8x1xf32>
      %184 = vector.broadcast %183 : vector<8x1xf32> to vector<8x8xf32>
      %185 = arith.addf %169, %184 : vector<8x8xf32>
      %cst_50 = arith.constant 1.000000e-03 : f32
      %186 = vector.broadcast %cst_50 : f32 to vector<8x1xf32>
      %187 = arith.mulf %186, %183 : vector<8x1xf32>
      %188 = arith.addf %156, %187 : vector<8x1xf32>
      %cst_51 = arith.constant dense<0xFF800000> : vector<8xf32>
      %189 = vector.multi_reduction <maximumf>, %185, %cst_51 [0] : vector<8x8xf32> to vector<8xf32>
      %190 = vector.shape_cast %189 : vector<8xf32> to vector<1x8xf32>
      %191 = vector.broadcast %190 : vector<1x8xf32> to vector<8x8xf32>
      %192 = arith.subf %185, %191 : vector<8x8xf32>
      %193 = math.exp %192 : vector<8x8xf32>
      %cst_52 = arith.constant dense<0.000000e+00> : vector<8xf32>
      %194 = vector.multi_reduction <add>, %193, %cst_52 [0] : vector<8x8xf32> to vector<8xf32>
      %195 = vector.shape_cast %194 : vector<8xf32> to vector<1x8xf32>
      %196 = math.log %195 : vector<1x8xf32>
      %197 = arith.addf %190, %196 : vector<1x8xf32>
      %198 = vector.broadcast %21 : f32 to vector<1x8xf32>
      %199 = arith.subf %198, %197 : vector<1x8xf32>
      %200 = vector.broadcast %199 : vector<1x8xf32> to vector<8x8xf32>
      %201 = arith.addf %185, %200 : vector<8x8xf32>
      %cst_53 = arith.constant 1.000000e-03 : f32
      %202 = vector.broadcast %cst_53 : f32 to vector<1x8xf32>
      %203 = arith.mulf %202, %199 : vector<1x8xf32>
      %204 = arith.addf %172, %203 : vector<1x8xf32>
      %cst_54 = arith.constant dense<0xFF800000> : vector<8xf32>
      %205 = vector.multi_reduction <maximumf>, %201, %cst_54 [1] : vector<8x8xf32> to vector<8xf32>
      %206 = vector.shape_cast %205 : vector<8xf32> to vector<8x1xf32>
      %207 = vector.broadcast %206 : vector<8x1xf32> to vector<8x8xf32>
      %208 = arith.subf %201, %207 : vector<8x8xf32>
      %209 = math.exp %208 : vector<8x8xf32>
      %cst_55 = arith.constant dense<0.000000e+00> : vector<8xf32>
      %210 = vector.multi_reduction <add>, %209, %cst_55 [1] : vector<8x8xf32> to vector<8xf32>
      %211 = vector.shape_cast %210 : vector<8xf32> to vector<8x1xf32>
      %212 = math.log %211 : vector<8x1xf32>
      %213 = arith.addf %206, %212 : vector<8x1xf32>
      %214 = vector.broadcast %19 : f32 to vector<8x1xf32>
      %215 = arith.subf %214, %213 : vector<8x1xf32>
      %216 = vector.broadcast %215 : vector<8x1xf32> to vector<8x8xf32>
      %217 = arith.addf %201, %216 : vector<8x8xf32>
      %cst_56 = arith.constant 1.000000e-03 : f32
      %218 = vector.broadcast %cst_56 : f32 to vector<8x1xf32>
      %219 = arith.mulf %218, %215 : vector<8x1xf32>
      %220 = arith.addf %188, %219 : vector<8x1xf32>
      %cst_57 = arith.constant dense<0xFF800000> : vector<8xf32>
      %221 = vector.multi_reduction <maximumf>, %217, %cst_57 [0] : vector<8x8xf32> to vector<8xf32>
      %222 = vector.shape_cast %221 : vector<8xf32> to vector<1x8xf32>
      %223 = vector.broadcast %222 : vector<1x8xf32> to vector<8x8xf32>
      %224 = arith.subf %217, %223 : vector<8x8xf32>
      %225 = math.exp %224 : vector<8x8xf32>
      %cst_58 = arith.constant dense<0.000000e+00> : vector<8xf32>
      %226 = vector.multi_reduction <add>, %225, %cst_58 [0] : vector<8x8xf32> to vector<8xf32>
      %227 = vector.shape_cast %226 : vector<8xf32> to vector<1x8xf32>
      %228 = math.log %227 : vector<1x8xf32>
      %229 = arith.addf %222, %228 : vector<1x8xf32>
      %230 = vector.broadcast %21 : f32 to vector<1x8xf32>
      %231 = arith.subf %230, %229 : vector<1x8xf32>
      %232 = vector.broadcast %231 : vector<1x8xf32> to vector<8x8xf32>
      %233 = arith.addf %217, %232 : vector<8x8xf32>
      %cst_59 = arith.constant 1.000000e-03 : f32
      %234 = vector.broadcast %cst_59 : f32 to vector<1x8xf32>
      %235 = arith.mulf %234, %231 : vector<1x8xf32>
      %236 = arith.addf %204, %235 : vector<1x8xf32>
      %cst_60 = arith.constant dense<0xFF800000> : vector<8xf32>
      %237 = vector.multi_reduction <maximumf>, %233, %cst_60 [1] : vector<8x8xf32> to vector<8xf32>
      %238 = vector.shape_cast %237 : vector<8xf32> to vector<8x1xf32>
      %239 = vector.broadcast %238 : vector<8x1xf32> to vector<8x8xf32>
      %240 = arith.subf %233, %239 : vector<8x8xf32>
      %241 = math.exp %240 : vector<8x8xf32>
      %cst_61 = arith.constant dense<0.000000e+00> : vector<8xf32>
      %242 = vector.multi_reduction <add>, %241, %cst_61 [1] : vector<8x8xf32> to vector<8xf32>
      %243 = vector.shape_cast %242 : vector<8xf32> to vector<8x1xf32>
      %244 = math.log %243 : vector<8x1xf32>
      %245 = arith.addf %238, %244 : vector<8x1xf32>
      %246 = vector.broadcast %19 : f32 to vector<8x1xf32>
      %247 = arith.subf %246, %245 : vector<8x1xf32>
      %248 = vector.broadcast %247 : vector<8x1xf32> to vector<8x8xf32>
      %249 = arith.addf %233, %248 : vector<8x8xf32>
      %cst_62 = arith.constant 1.000000e-03 : f32
      %250 = vector.broadcast %cst_62 : f32 to vector<8x1xf32>
      %251 = arith.mulf %250, %247 : vector<8x1xf32>
      %252 = arith.addf %220, %251 : vector<8x1xf32>
      %cst_63 = arith.constant dense<0xFF800000> : vector<8xf32>
      %253 = vector.multi_reduction <maximumf>, %249, %cst_63 [0] : vector<8x8xf32> to vector<8xf32>
      %254 = vector.shape_cast %253 : vector<8xf32> to vector<1x8xf32>
      %255 = vector.broadcast %254 : vector<1x8xf32> to vector<8x8xf32>
      %256 = arith.subf %249, %255 : vector<8x8xf32>
      %257 = math.exp %256 : vector<8x8xf32>
      %cst_64 = arith.constant dense<0.000000e+00> : vector<8xf32>
      %258 = vector.multi_reduction <add>, %257, %cst_64 [0] : vector<8x8xf32> to vector<8xf32>
      %259 = vector.shape_cast %258 : vector<8xf32> to vector<1x8xf32>
      %260 = math.log %259 : vector<1x8xf32>
      %261 = arith.addf %254, %260 : vector<1x8xf32>
      %262 = vector.broadcast %21 : f32 to vector<1x8xf32>
      %263 = arith.subf %262, %261 : vector<1x8xf32>
      %264 = vector.broadcast %263 : vector<1x8xf32> to vector<8x8xf32>
      %265 = arith.addf %249, %264 : vector<8x8xf32>
      %cst_65 = arith.constant 1.000000e-03 : f32
      %266 = vector.broadcast %cst_65 : f32 to vector<1x8xf32>
      %267 = arith.mulf %266, %263 : vector<1x8xf32>
      %268 = arith.addf %236, %267 : vector<1x8xf32>
      %cst_66 = arith.constant dense<0xFF800000> : vector<8xf32>
      %269 = vector.multi_reduction <maximumf>, %265, %cst_66 [1] : vector<8x8xf32> to vector<8xf32>
      %270 = vector.shape_cast %269 : vector<8xf32> to vector<8x1xf32>
      %271 = vector.broadcast %270 : vector<8x1xf32> to vector<8x8xf32>
      %272 = arith.subf %265, %271 : vector<8x8xf32>
      %273 = math.exp %272 : vector<8x8xf32>
      %cst_67 = arith.constant dense<0.000000e+00> : vector<8xf32>
      %274 = vector.multi_reduction <add>, %273, %cst_67 [1] : vector<8x8xf32> to vector<8xf32>
      %275 = vector.shape_cast %274 : vector<8xf32> to vector<8x1xf32>
      %276 = math.log %275 : vector<8x1xf32>
      %277 = arith.addf %270, %276 : vector<8x1xf32>
      %278 = vector.broadcast %19 : f32 to vector<8x1xf32>
      %279 = arith.subf %278, %277 : vector<8x1xf32>
      %280 = vector.broadcast %279 : vector<8x1xf32> to vector<8x8xf32>
      %281 = arith.addf %265, %280 : vector<8x8xf32>
      %cst_68 = arith.constant 1.000000e-03 : f32
      %282 = vector.broadcast %cst_68 : f32 to vector<8x1xf32>
      %283 = arith.mulf %282, %279 : vector<8x1xf32>
      %284 = arith.addf %252, %283 : vector<8x1xf32>
      %cst_69 = arith.constant dense<0xFF800000> : vector<8xf32>
      %285 = vector.multi_reduction <maximumf>, %281, %cst_69 [0] : vector<8x8xf32> to vector<8xf32>
      %286 = vector.shape_cast %285 : vector<8xf32> to vector<1x8xf32>
      %287 = vector.broadcast %286 : vector<1x8xf32> to vector<8x8xf32>
      %288 = arith.subf %281, %287 : vector<8x8xf32>
      %289 = math.exp %288 : vector<8x8xf32>
      %cst_70 = arith.constant dense<0.000000e+00> : vector<8xf32>
      %290 = vector.multi_reduction <add>, %289, %cst_70 [0] : vector<8x8xf32> to vector<8xf32>
      %291 = vector.shape_cast %290 : vector<8xf32> to vector<1x8xf32>
      %292 = math.log %291 : vector<1x8xf32>
      %293 = arith.addf %286, %292 : vector<1x8xf32>
      %294 = vector.broadcast %21 : f32 to vector<1x8xf32>
      %295 = arith.subf %294, %293 : vector<1x8xf32>
      %296 = vector.broadcast %295 : vector<1x8xf32> to vector<8x8xf32>
      %297 = arith.addf %281, %296 : vector<8x8xf32>
      %cst_71 = arith.constant 1.000000e-03 : f32
      %298 = vector.broadcast %cst_71 : f32 to vector<1x8xf32>
      %299 = arith.mulf %298, %295 : vector<1x8xf32>
      %300 = arith.addf %268, %299 : vector<1x8xf32>
      %cst_72 = arith.constant dense<0xFF800000> : vector<8xf32>
      %301 = vector.multi_reduction <maximumf>, %297, %cst_72 [1] : vector<8x8xf32> to vector<8xf32>
      %302 = vector.shape_cast %301 : vector<8xf32> to vector<8x1xf32>
      %303 = vector.broadcast %302 : vector<8x1xf32> to vector<8x8xf32>
      %304 = arith.subf %297, %303 : vector<8x8xf32>
      %305 = math.exp %304 : vector<8x8xf32>
      %cst_73 = arith.constant dense<0.000000e+00> : vector<8xf32>
      %306 = vector.multi_reduction <add>, %305, %cst_73 [1] : vector<8x8xf32> to vector<8xf32>
      %307 = vector.shape_cast %306 : vector<8xf32> to vector<8x1xf32>
      %308 = math.log %307 : vector<8x1xf32>
      %309 = arith.addf %302, %308 : vector<8x1xf32>
      %310 = vector.broadcast %19 : f32 to vector<8x1xf32>
      %311 = arith.subf %310, %309 : vector<8x1xf32>
      %312 = vector.broadcast %311 : vector<8x1xf32> to vector<8x8xf32>
      %313 = arith.addf %297, %312 : vector<8x8xf32>
      %cst_74 = arith.constant 1.000000e-03 : f32
      %314 = vector.broadcast %cst_74 : f32 to vector<8x1xf32>
      %315 = arith.mulf %314, %311 : vector<8x1xf32>
      %316 = arith.addf %284, %315 : vector<8x1xf32>
      %cst_75 = arith.constant dense<0xFF800000> : vector<8xf32>
      %317 = vector.multi_reduction <maximumf>, %313, %cst_75 [0] : vector<8x8xf32> to vector<8xf32>
      %318 = vector.shape_cast %317 : vector<8xf32> to vector<1x8xf32>
      %319 = vector.broadcast %318 : vector<1x8xf32> to vector<8x8xf32>
      %320 = arith.subf %313, %319 : vector<8x8xf32>
      %321 = math.exp %320 : vector<8x8xf32>
      %cst_76 = arith.constant dense<0.000000e+00> : vector<8xf32>
      %322 = vector.multi_reduction <add>, %321, %cst_76 [0] : vector<8x8xf32> to vector<8xf32>
      %323 = vector.shape_cast %322 : vector<8xf32> to vector<1x8xf32>
      %324 = math.log %323 : vector<1x8xf32>
      %325 = arith.addf %318, %324 : vector<1x8xf32>
      %326 = vector.broadcast %21 : f32 to vector<1x8xf32>
      %327 = arith.subf %326, %325 : vector<1x8xf32>
      %328 = vector.broadcast %327 : vector<1x8xf32> to vector<8x8xf32>
      %329 = arith.addf %313, %328 : vector<8x8xf32>
      %cst_77 = arith.constant 1.000000e-03 : f32
      %330 = vector.broadcast %cst_77 : f32 to vector<1x8xf32>
      %331 = arith.mulf %330, %327 : vector<1x8xf32>
      %332 = arith.addf %300, %331 : vector<1x8xf32>
      %cst_78 = arith.constant dense<0xFF800000> : vector<8xf32>
      %333 = vector.multi_reduction <maximumf>, %329, %cst_78 [1] : vector<8x8xf32> to vector<8xf32>
      %334 = vector.shape_cast %333 : vector<8xf32> to vector<8x1xf32>
      %335 = vector.broadcast %334 : vector<8x1xf32> to vector<8x8xf32>
      %336 = arith.subf %329, %335 : vector<8x8xf32>
      %337 = math.exp %336 : vector<8x8xf32>
      %cst_79 = arith.constant dense<0.000000e+00> : vector<8xf32>
      %338 = vector.multi_reduction <add>, %337, %cst_79 [1] : vector<8x8xf32> to vector<8xf32>
      %339 = vector.shape_cast %338 : vector<8xf32> to vector<8x1xf32>
      %340 = math.log %339 : vector<8x1xf32>
      %341 = arith.addf %334, %340 : vector<8x1xf32>
      %342 = vector.broadcast %19 : f32 to vector<8x1xf32>
      %343 = arith.subf %342, %341 : vector<8x1xf32>
      %344 = vector.broadcast %343 : vector<8x1xf32> to vector<8x8xf32>
      %345 = arith.addf %329, %344 : vector<8x8xf32>
      %cst_80 = arith.constant 1.000000e-03 : f32
      %346 = vector.broadcast %cst_80 : f32 to vector<8x1xf32>
      %347 = arith.mulf %346, %343 : vector<8x1xf32>
      %348 = arith.addf %316, %347 : vector<8x1xf32>
      %cst_81 = arith.constant dense<0xFF800000> : vector<8xf32>
      %349 = vector.multi_reduction <maximumf>, %345, %cst_81 [0] : vector<8x8xf32> to vector<8xf32>
      %350 = vector.shape_cast %349 : vector<8xf32> to vector<1x8xf32>
      %351 = vector.broadcast %350 : vector<1x8xf32> to vector<8x8xf32>
      %352 = arith.subf %345, %351 : vector<8x8xf32>
      %353 = math.exp %352 : vector<8x8xf32>
      %cst_82 = arith.constant dense<0.000000e+00> : vector<8xf32>
      %354 = vector.multi_reduction <add>, %353, %cst_82 [0] : vector<8x8xf32> to vector<8xf32>
      %355 = vector.shape_cast %354 : vector<8xf32> to vector<1x8xf32>
      %356 = math.log %355 : vector<1x8xf32>
      %357 = arith.addf %350, %356 : vector<1x8xf32>
      %358 = vector.broadcast %21 : f32 to vector<1x8xf32>
      %359 = arith.subf %358, %357 : vector<1x8xf32>
      %360 = vector.broadcast %359 : vector<1x8xf32> to vector<8x8xf32>
      %361 = arith.addf %345, %360 : vector<8x8xf32>
      %cst_83 = arith.constant 1.000000e-03 : f32
      %362 = vector.broadcast %cst_83 : f32 to vector<1x8xf32>
      %363 = arith.mulf %362, %359 : vector<1x8xf32>
      %364 = arith.addf %332, %363 : vector<1x8xf32>
      %365 = math.absf %343 : vector<8x1xf32>
      %366 = vector.shape_cast %365 : vector<8x1xf32> to vector<1x8x1xf32>
      %cst_84 = arith.constant dense<0.000000e+00> : vector<1xf32>
      %367 = vector.multi_reduction <add>, %366, %cst_84 [1, 2] : vector<1x8x1xf32> to vector<1xf32>
      %368 = vector.shape_cast %367 : vector<1xf32> to vector<1x1x1xf32>
      %369 = vector.extract %368[0, 0, 0] : f32 from vector<1x1x1xf32>
      %cst_85 = arith.constant 1.000000e-03 : f32
      %370 = arith.mulf %cst_85, %369 : f32
      %c1_i32 = arith.constant 1 : i32
      %371 = arith.addi %arg5, %c1_i32 : i32
      scf.yield %371, %348, %364, %361, %370 : i32, vector<8x1xf32>, vector<1x8xf32>, vector<8x8xf32>, f32
    }
    %26 = math.exp %25#3 : vector<8x8xf32>
    %27 = arith.mulf %26, %17 : vector<8x8xf32>
    %28 = vector.shape_cast %27 : vector<8x8xf32> to vector<1x8x8xf32>
    %cst_14 = arith.constant dense<0.000000e+00> : vector<1xf32>
    %29 = vector.multi_reduction <add>, %28, %cst_14 [1, 2] : vector<1x8x8xf32> to vector<1xf32>
    %30 = vector.shape_cast %29 : vector<1xf32> to vector<1x1x1xf32>
    %31 = vector.extract %30[0, 0, 0] : f32 from vector<1x1x1xf32>
    %32 = vector.broadcast %31 : f32 to vector<1x1xf32>
    %c0_15 = arith.constant 0 : index
    %c0_16 = arith.constant 0 : index
    %33 = vector.load %arg2[%c0_15, %c0_16] : memref<1x1xf32, #tpu.memory_space<vmem>>, vector<1x1xf32>
    tpu.vector_store %arg2[%c0_15, %c0_16], %32 {strides = array<i32>} : memref<1x1xf32, #tpu.memory_space<vmem>>, vector<1x1xf32>,
    %c0_17 = arith.constant 0 : index
    %c0_18 = arith.constant 0 : index
    %34 = vector.load %arg3[%c0_17, %c0_18] : memref<8x8xf32, #tpu.memory_space<vmem>>, vector<8x8xf32>
    tpu.vector_store %arg3[%c0_17, %c0_18], %26 {strides = array<i32>} : memref<8x8xf32, #tpu.memory_space<vmem>>, vector<8x8xf32>,
    %c0_19 = arith.constant 0 : index
    %c0_20 = arith.constant 0 : index
    %35 = vector.load %arg4[%c0_19, %c0_20] : memref<8x8xf32, #tpu.memory_space<vmem>>, vector<8x8xf32>
    tpu.vector_store %arg4[%c0_19, %c0_20], %17 {strides = array<i32>} : memref<8x8xf32, #tpu.memory_space<vmem>>, vector<8x8xf32>,
    return
  }
  func.func @transform_0(%arg0: i32) -> (i32, i32) {
    %c0_i32 = arith.constant 0 : i32
    %c0_i32_0 = arith.constant 0 : i32
    %c0_i32_1 = arith.constant 0 : i32
    return %c0_i32, %c0_i32_0 : i32, i32
  }
  func.func @transform_1(%arg0: i32) -> (i32, i32) {
    %c0_i32 = arith.constant 0 : i32
    %c0_i32_0 = arith.constant 0 : i32
    %c0_i32_1 = arith.constant 0 : i32
    return %c0_i32, %c0_i32_0 : i32, i32
  }
  func.func @transform_2(%arg0: i32) -> (i32, i32) {
    %c0_i32 = arith.constant 0 : i32
    %c0_i32_0 = arith.constant 0 : i32
    %c0_i32_1 = arith.constant 0 : i32
    return %c0_i32, %c0_i32_0 : i32, i32
  }
  func.func @transform_3(%arg0: i32) -> (i32, i32) {
    %c0_i32 = arith.constant 0 : i32
    %c0_i32_0 = arith.constant 0 : i32
    %c0_i32_1 = arith.constant 0 : i32
    return %c0_i32, %c0_i32_0 : i32, i32
  }
}

</mosaic_0001>

<llo_original>
// kernel: tpu_custom_call.1
$region0: #{tpu_custom_call.1}
  #allocation0 [shape = 'u32[]', space=smem, size = 0x4, offset = 0x4, fixed_abs, tag = 'smem constant byte address 0x4 - core index']
  #allocation1 [shape = 'u32[72,128]{1,0:T(1,128)}', space=vmem, size = 0x9000, scoped, tag = 'internal scratch']
  %s0 = inlined_call_operand.hbm [shape: f32[16,32], index: 0, kind: input, shape index: {}]
  %s1 = inlined_call_operand.hbm [shape: f32[1,1], index: 1, kind: output, shape index: {0}]
  %s2 = inlined_call_operand.hbm [shape: f32[8,8], index: 2, kind: output, shape index: {1}]
  %s3 = inlined_call_operand.hbm [shape: f32[8,8], index: 3, kind: output, shape index: {2}]
  %4 = xla_tuple %s1, %s2, %s3
  %s5 = sld [smem:[#allocation0]]
  $region41: #{tpu_custom_call.1} parent=0
    _
  %s7 = ssub.s32 1, %s5
  %s8 = scalar_select 0, %s7, %s5
  $region1: #{tpu_custom_call.1} parent=0
    #allocation2 [shape = 'u8[8192]{0}', space=vmem, size = 0x2000, scoped, tag = 'input window, operand 0, single buffered']
    #allocation3 [shape = 's32[1]{0}', space=sflag, size = 0x4, scoped, tag = 'scoped memory for tpu_custom_call.1']
    #allocation4 [shape = 's32[1]{0}', space=sflag, size = 0x4, scoped, tag = 'scoped memory for tpu_custom_call.1']
    #allocation5 [shape = 'u8[512]{0}', space=vmem, size = 0x400, scoped, tag = 'output window, operand 0, single buffered']
    #allocation6 [shape = 'u8[4096]{0}', space=vmem, size = 0x1000, scoped, tag = 'output window, operand 1, single buffered']
    #allocation7 [shape = 's32[1]{0}', space=sflag, size = 0x4, scoped, tag = 'scoped memory for tpu_custom_call.1']
    #allocation8 [shape = 'u8[4096]{0}', space=vmem, size = 0x1000, scoped, tag = 'output window, operand 2, single buffered']
    %9 = vsyncpa [#allocation3], 0
    %10 = vsyncpa [#allocation4], 0
    %11 = vsyncpa [#allocation7], 0
    // Predicated region
    $region2: #{tpu_custom_call.1} parent=1 // pred_check
      _
    $region3: #{tpu_custom_call.1} parent=1 // pred_check_branch
      %13 = sbr.rel (0) target = $region5
    $region4: #{tpu_custom_call.1} parent=1 // pred_region
      %15 = vsyncadd [#allocation3], 0
      %s16 = sshll.u32 %s0, 4
      %s17 = int_to_ptr.hbm [resolvable:$true] %s16
      %s18 = sshll.u32 [#allocation2], 4
      %s19 = int_to_ptr.vmem [resolvable:$true] %s18
      %24 = dma.hbm_to_vmem [thread:$0]  %s17, 256, %s19, [#allocation3], 128, 128, 8
    $region5: #{tpu_custom_call.1} parent=1 // pred_fallthru
      _
    // Predicated region
    $region6: #{tpu_custom_call.1} parent=1 // pred_check
      _
    $region7: #{tpu_custom_call.1} parent=1 // pred_check_branch
      %26 = sbr.rel (0) target = $region9
    $region8: #{tpu_custom_call.1} parent=1 // pred_region
      %28 = dma.done [#allocation3], 256
    $region9: #{tpu_custom_call.1} parent=1 // pred_fallthru
      _
    %v29 = vld [vmem:[#allocation2] sm:$0xff]
    %v30 = vld [vmem:[#allocation2 + $0x8] sm:$0xff]
    %vm31 = vcmask 261120
    %v33 = vsel %vm31, %v29, 0
    %v36 = vsel %vm31, %v30, 0
    %38 = vmatpush.xpose.msra.mxu0 0.0
    %39 = vmatpush.xpose.msra.mxu0 0.0
    %40 = vmatpush.xpose.msra.mxu0 0.0
    %41 = vmatpush.xpose.msra.mxu0 0.0
    %42 = vmatpush.xpose.msra.mxu0 0.0
    %43 = vmatpush.xpose.msra.mxu0 0.0
    %44 = vmatpush.xpose.msra.mxu0 0.0
    %45 = vmatpush.xpose.msra.mxu0 0.0
    %46 = vmatpush.xpose.msra.mxu0 0.0
    %47 = vmatpush.xpose.msra.mxu0 0.0
    %48 = vmatpush.xpose.msra.mxu0 0.0
    %49 = vmatpush.xpose.msra.mxu0 0.0
    %50 = vmatpush.xpose.msra.mxu0 0.0
    %51 = vmatpush.xpose.msra.mxu0 0.0
    %52 = vmatpush.xpose.msra.mxu0 0.0
    %53 = vmatpush.xpose.msra.mxu0 %v36
    %54 = vmatmul.f32.gmra.mxu0 %v33
    %v55 = vpop.f32.mrf.mxu0
    %v56 = vadd.f32 0.0, %v55
    %57 = vdwg.mxu0
    %v58 = vmul.f32 %v29, %v29
    %v59 = vsel %vm31, %v58, 0.0
    %60 = vadd.xlane.f32.xlu0 %v59
    %v61 = vpop.xlane.xlu0 %60
    %v62 = vmul.f32 %v30, %v30
    %v64 = vsel %vm31, 1.0, 0
    %v67 = vsel %vm31, %v62, 0
    %69 = vmatpush.xpose.msra.mxu0 0.0
    %70 = vmatpush.xpose.msra.mxu0 0.0
    %71 = vmatpush.xpose.msra.mxu0 0.0
    %72 = vmatpush.xpose.msra.mxu0 0.0
    %73 = vmatpush.xpose.msra.mxu0 0.0
    %74 = vmatpush.xpose.msra.mxu0 0.0
    %75 = vmatpush.xpose.msra.mxu0 0.0
    %76 = vmatpush.xpose.msra.mxu0 0.0
    %77 = vmatpush.xpose.msra.mxu0 0.0
    %78 = vmatpush.xpose.msra.mxu0 0.0
    %79 = vmatpush.xpose.msra.mxu0 0.0
    %80 = vmatpush.xpose.msra.mxu0 0.0
    %81 = vmatpush.xpose.msra.mxu0 0.0
    %82 = vmatpush.xpose.msra.mxu0 0.0
    %83 = vmatpush.xpose.msra.mxu0 0.0
    %84 = vmatpush.xpose.msra.mxu0 %v67
    %85 = vmatmul.f32.gmra.mxu0 %v64
    %v86 = vpop.f32.mrf.mxu0
    %v87 = vadd.f32 0.0, %v86
    %88 = vdwg.mxu0
    %v89 = vperm.slane %v87, 0
    %v90 = vadd.f32 %v61, %v89
    %v91 = vmul.f32 %v56, 2.0
    %v92 = vsub.f32 %v90, %v91
    %v93 = vmax.f32 %v92, 0.0
    // While loop
    $region10: #{tpu_custom_call.1} parent=1 // loop_pre_header
      _
    $region11: #{tpu_custom_call.1} parent=1 // loop_header
      %s95 = sphi 0, %s524
      %v96 = vphi 0.0, %v486
      %v97 = vphi 0.0, %v510
      %v98 = vphi 0.0, %v508
      %s99 = sphi inf, %s523
      %p100 = scmp.lt.s32.totalorder %s95, 10
      %p101 = scmp.ge.f32.partialorder %s99, 0.1
      %p102 = pnand %p100, %p101
      %p103 = pneg %p102
    $region12: #{tpu_custom_call.1} parent=1 // loop_header_branch
      %105 = sbr.rel (%p102) target = $region16
    $region13: #{tpu_custom_call.1} parent=1 // loop_body
      %v106 = vsub.f32 0.0, %v93
      %v107 = vadd.f32 %v106, %v96
      %v108 = vadd.f32 %v107, %v97
      %v109 = vmul.f32 %v108, 1000.0
      %vm110 = vcmask 64512
      %v111 = vsel %vm110, %v109, -inf
      %112 = vmax.xlane.f32.xlu0 %v111
      %v113 = vpop.xlane.xlu0 %112
      %v114 = vsub.f32 %v109, %v113
      %v115 = vmul.f32 %v114, 1.442695
      %v116 = vpow.pop %v115
      %v117 = vsel %vm110, %v116, 0.0
      %118 = vadd.xlane.f32.xlu0 %v117
      %v119 = vpop.xlane.xlu0 %118
      %v120 = vlog2.pop %v119
      %v121 = vmul.f32 %v120, 0.6931472
      %v122 = vadd.f32 %v113, %v121
      %v123 = vsub.f32 -2.0794413, %v122
      %v124 = vadd.f32 %v109, %v123
      %v125 = vmul.f32 %v123, 0.001
      %v126 = vadd.f32 %v96, %v125
      %v127 = vsel %vm110, %v124, -inf
      %v128 = vrot.slane %v127, 4
      %v129 = vmax.f32 %v127, %v128
      %v130 = vrot.slane %v129, 2
      %v131 = vmax.f32 %v129, %v130
      %v132 = vrot.slane %v131, 1
      %v133 = vmax.f32 %v131, %v132
      %v134 = vsub.f32 %v124, %v133
      %v135 = vmul.f32 %v134, 1.442695
      %v136 = vpow.pop %v135
      %v137 = vsel %vm110, %v136, 0.0
      %v138 = vrot.slane %v137, 4
      %v139 = vadd.f32 %v137, %v138
      %v140 = vrot.slane %v139, 2
      %v141 = vadd.f32 %v139, %v140
      %v142 = vrot.slane %v141, 1
      %v143 = vadd.f32 %v141, %v142
      %v144 = vlog2.pop %v143
      %v145 = vmul.f32 %v144, 0.6931472
      %v146 = vadd.f32 %v133, %v145
      %v147 = vsub.f32 -2.0794413, %v146
      %v148 = vadd.f32 %v124, %v147
      %v149 = vmul.f32 %v147, 0.001
      %v150 = vadd.f32 %v97, %v149
      %v151 = vsel %vm110, %v148, -inf
      %152 = vmax.xlane.f32.xlu0 %v151
      %v153 = vpop.xlane.xlu0 %152
      %v154 = vsub.f32 %v148, %v153
      %v155 = vmul.f32 %v154, 1.442695
      %v156 = vpow.pop %v155
      %v157 = vsel %vm110, %v156, 0.0
      %158 = vadd.xlane.f32.xlu0 %v157
      %v159 = vpop.xlane.xlu0 %158
      %v160 = vlog2.pop %v159
      %v161 = vmul.f32 %v160, 0.6931472
      %v162 = vadd.f32 %v153, %v161
      %v163 = vsub.f32 -2.0794413, %v162
      %v164 = vadd.f32 %v148, %v163
      %v165 = vmul.f32 %v163, 0.001
      %v166 = vadd.f32 %v126, %v165
      %v167 = vsel %vm110, %v164, -inf
      %v168 = vrot.slane %v167, 4
      %v169 = vmax.f32 %v167, %v168
      %v170 = vrot.slane %v169, 2
      %v171 = vmax.f32 %v169, %v170
      %v172 = vrot.slane %v171, 1
      %v173 = vmax.f32 %v171, %v172
      %v174 = vsub.f32 %v164, %v173
      %v175 = vmul.f32 %v174, 1.442695
      %v176 = vpow.pop %v175
      %v177 = vsel %vm110, %v176, 0.0
      %v178 = vrot.slane %v177, 4
      %v179 = vadd.f32 %v177, %v178
      %v180 = vrot.slane %v179, 2
      %v181 = vadd.f32 %v179, %v180
      %v182 = vrot.slane %v181, 1
      %v183 = vadd.f32 %v181, %v182
      %v184 = vlog2.pop %v183
      %v185 = vmul.f32 %v184, 0.6931472
      %v186 = vadd.f32 %v173, %v185
      %v187 = vsub.f32 -2.0794413, %v186
      %v188 = vadd.f32 %v164, %v187
      %v189 = vmul.f32 %v187, 0.001
      %v190 = vadd.f32 %v150, %v189
      %v191 = vsel %vm110, %v188, -inf
      %192 = vmax.xlane.f32.xlu0 %v191
      %v193 = vpop.xlane.xlu0 %192
      %v194 = vsub.f32 %v188, %v193
      %v195 = vmul.f32 %v194, 1.442695
      %v196 = vpow.pop %v195
      %v197 = vsel %vm110, %v196, 0.0
      %198 = vadd.xlane.f32.xlu0 %v197
      %v199 = vpop.xlane.xlu0 %198
      %v200 = vlog2.pop %v199
      %v201 = vmul.f32 %v200, 0.6931472
      %v202 = vadd.f32 %v193, %v201
      %v203 = vsub.f32 -2.0794413, %v202
      %v204 = vadd.f32 %v188, %v203
      %v205 = vmul.f32 %v203, 0.001
      %v206 = vadd.f32 %v166, %v205
      %v207 = vsel %vm110, %v204, -inf
      %v208 = vrot.slane %v207, 4
      %v209 = vmax.f32 %v207, %v208
      %v210 = vrot.slane %v209, 2
      %v211 = vmax.f32 %v209, %v210
      %v212 = vrot.slane %v211, 1
      %v213 = vmax.f32 %v211, %v212
      %v214 = vsub.f32 %v204, %v213
      %v215 = vmul.f32 %v214, 1.442695
      %v216 = vpow.pop %v215
      %v217 = vsel %vm110, %v216, 0.0
      %v218 = vrot.slane %v217, 4
      %v219 = vadd.f32 %v217, %v218
      %v220 = vrot.slane %v219, 2
      %v221 = vadd.f32 %v219, %v220
      %v222 = vrot.slane %v221, 1
      %v223 = vadd.f32 %v221, %v222
      %v224 = vlog2.pop %v223
      %v225 = vmul.f32 %v224, 0.6931472
      %v226 = vadd.f32 %v213, %v225
      %v227 = vsub.f32 -2.0794413, %v226
      %v228 = vadd.f32 %v204, %v227
      %v229 = vmul.f32 %v227, 0.001
      %v230 = vadd.f32 %v190, %v229
      %v231 = vsel %vm110, %v228, -inf
      %232 = vmax.xlane.f32.xlu0 %v231
      %v233 = vpop.xlane.xlu0 %232
      %v234 = vsub.f32 %v228, %v233
      %v235 = vmul.f32 %v234, 1.442695
      %v236 = vpow.pop %v235
      %v237 = vsel %vm110, %v236, 0.0
      %238 = vadd.xlane.f32.xlu0 %v237
      %v239 = vpop.xlane.xlu0 %238
      %v240 = vlog2.pop %v239
      %v241 = vmul.f32 %v240, 0.6931472
      %v242 = vadd.f32 %v233, %v241
      %v243 = vsub.f32 -2.0794413, %v242
      %v244 = vadd.f32 %v228, %v243
      %v245 = vmul.f32 %v243, 0.001
      %v246 = vadd.f32 %v206, %v245
      %v247 = vsel %vm110, %v244, -inf
      %v248 = vrot.slane %v247, 4
      %v249 = vmax.f32 %v247, %v248
      %v250 = vrot.slane %v249, 2
      %v251 = vmax.f32 %v249, %v250
      %v252 = vrot.slane %v251, 1
      %v253 = vmax.f32 %v251, %v252
      %v254 = vsub.f32 %v244, %v253
      %v255 = vmul.f32 %v254, 1.442695
      %v256 = vpow.pop %v255
      %v257 = vsel %vm110, %v256, 0.0
      %v258 = vrot.slane %v257, 4
      %v259 = vadd.f32 %v257, %v258
      %v260 = vrot.slane %v259, 2
      %v261 = vadd.f32 %v259, %v260
      %v262 = vrot.slane %v261, 1
      %v263 = vadd.f32 %v261, %v262
      %v264 = vlog2.pop %v263
      %v265 = vmul.f32 %v264, 0.6931472
      %v266 = vadd.f32 %v253, %v265
      %v267 = vsub.f32 -2.0794413, %v266
      %v268 = vadd.f32 %v244, %v267
      %v269 = vmul.f32 %v267, 0.001
      %v270 = vadd.f32 %v230, %v269
      %v271 = vsel %vm110, %v268, -inf
      %272 = vmax.xlane.f32.xlu0 %v271
      %v273 = vpop.xlane.xlu0 %272
      %v274 = vsub.f32 %v268, %v273
      %v275 = vmul.f32 %v274, 1.442695
      %v276 = vpow.pop %v275
      %v277 = vsel %vm110, %v276, 0.0
      %278 = vadd.xlane.f32.xlu0 %v277
      %v279 = vpop.xlane.xlu0 %278
      %v280 = vlog2.pop %v279
      %v281 = vmul.f32 %v280, 0.6931472
      %v282 = vadd.f32 %v273, %v281
      %v283 = vsub.f32 -2.0794413, %v282
      %v284 = vadd.f32 %v268, %v283
      %v285 = vmul.f32 %v283, 0.001
      %v286 = vadd.f32 %v246, %v285
      %v287 = vsel %vm110, %v284, -inf
      %v288 = vrot.slane %v287, 4
      %v289 = vmax.f32 %v287, %v288
      %v290 = vrot.slane %v289, 2
      %v291 = vmax.f32 %v289, %v290
      %v292 = vrot.slane %v291, 1
      %v293 = vmax.f32 %v291, %v292
      %v294 = vsub.f32 %v284, %v293
      %v295 = vmul.f32 %v294, 1.442695
      %v296 = vpow.pop %v295
      %v297 = vsel %vm110, %v296, 0.0
      %v298 = vrot.slane %v297, 4
      %v299 = vadd.f32 %v297, %v298
      %v300 = vrot.slane %v299, 2
      %v301 = vadd.f32 %v299, %v300
      %v302 = vrot.slane %v301, 1
      %v303 = vadd.f32 %v301, %v302
      %v304 = vlog2.pop %v303
      %v305 = vmul.f32 %v304, 0.6931472
      %v306 = vadd.f32 %v293, %v305
      %v307 = vsub.f32 -2.0794413, %v306
      %v308 = vadd.f32 %v284, %v307
      %v309 = vmul.f32 %v307, 0.001
      %v310 = vadd.f32 %v270, %v309
      %v311 = vsel %vm110, %v308, -inf
      %312 = vmax.xlane.f32.xlu0 %v311
      %v313 = vpop.xlane.xlu0 %312
      %v314 = vsub.f32 %v308, %v313
      %v315 = vmul.f32 %v314, 1.442695
      %v316 = vpow.pop %v315
      %v317 = vsel %vm110, %v316, 0.0
      %318 = vadd.xlane.f32.xlu0 %v317
      %v319 = vpop.xlane.xlu0 %318
      %v320 = vlog2.pop %v319
      %v321 = vmul.f32 %v320, 0.6931472
      %v322 = vadd.f32 %v313, %v321
      %v323 = vsub.f32 -2.0794413, %v322
      %v324 = vadd.f32 %v308, %v323
      %v325 = vmul.f32 %v323, 0.001
      %v326 = vadd.f32 %v286, %v325
      %v327 = vsel %vm110, %v324, -inf
      %v328 = vrot.slane %v327, 4
      %v329 = vmax.f32 %v327, %v328
      %v330 = vrot.slane %v329, 2
      %v331 = vmax.f32 %v329, %v330
      %v332 = vrot.slane %v331, 1
      %v333 = vmax.f32 %v331, %v332
      %v334 = vsub.f32 %v324, %v333
      %v335 = vmul.f32 %v334, 1.442695
      %v336 = vpow.pop %v335
      %v337 = vsel %vm110, %v336, 0.0
      %v338 = vrot.slane %v337, 4
      %v339 = vadd.f32 %v337, %v338
      %v340 = vrot.slane %v339, 2
      %v341 = vadd.f32 %v339, %v340
      %v342 = vrot.slane %v341, 1
      %v343 = vadd.f32 %v341, %v342
      %v344 = vlog2.pop %v343
      %v345 = vmul.f32 %v344, 0.6931472
      %v346 = vadd.f32 %v333, %v345
      %v347 = vsub.f32 -2.0794413, %v346
      %v348 = vadd.f32 %v324, %v347
      %v349 = vmul.f32 %v347, 0.001
      %v350 = vadd.f32 %v310, %v349
      %v351 = vsel %vm110, %v348, -inf
      %352 = vmax.xlane.f32.xlu0 %v351
      %v353 = vpop.xlane.xlu0 %352
      %v354 = vsub.f32 %v348, %v353
      %v355 = vmul.f32 %v354, 1.442695
      %v356 = vpow.pop %v355
      %v357 = vsel %vm110, %v356, 0.0
      %358 = vadd.xlane.f32.xlu0 %v357
      %v359 = vpop.xlane.xlu0 %358
      %v360 = vlog2.pop %v359
      %v361 = vmul.f32 %v360, 0.6931472
      %v362 = vadd.f32 %v353, %v361
      %v363 = vsub.f32 -2.0794413, %v362
      %v364 = vadd.f32 %v348, %v363
      %v365 = vmul.f32 %v363, 0.001
      %v366 = vadd.f32 %v326, %v365
      %v367 = vsel %vm110, %v364, -inf
      %v368 = vrot.slane %v367, 4
      %v369 = vmax.f32 %v367, %v368
      %v370 = vrot.slane %v369, 2
      %v371 = vmax.f32 %v369, %v370
      %v372 = vrot.slane %v371, 1
      %v373 = vmax.f32 %v371, %v372
      %v374 = vsub.f32 %v364, %v373
      %v375 = vmul.f32 %v374, 1.442695
      %v376 = vpow.pop %v375
      %v377 = vsel %vm110, %v376, 0.0
      %v378 = vrot.slane %v377, 4
      %v379 = vadd.f32 %v377, %v378
      %v380 = vrot.slane %v379, 2
      %v381 = vadd.f32 %v379, %v380
      %v382 = vrot.slane %v381, 1
      %v383 = vadd.f32 %v381, %v382
      %v384 = vlog2.pop %v383
      %v385 = vmul.f32 %v384, 0.6931472
      %v386 = vadd.f32 %v373, %v385
      %v387 = vsub.f32 -2.0794413, %v386
      %v388 = vadd.f32 %v364, %v387
      %v389 = vmul.f32 %v387, 0.001
      %v390 = vadd.f32 %v350, %v389
      %v391 = vsel %vm110, %v388, -inf
      %392 = vmax.xlane.f32.xlu0 %v391
      %v393 = vpop.xlane.xlu0 %392
      %v394 = vsub.f32 %v388, %v393
      %v395 = vmul.f32 %v394, 1.442695
      %v396 = vpow.pop %v395
      %v397 = vsel %vm110, %v396, 0.0
      %398 = vadd.xlane.f32.xlu0 %v397
      %v399 = vpop.xlane.xlu0 %398
      %v400 = vlog2.pop %v399
      %v401 = vmul.f32 %v400, 0.6931472
      %v402 = vadd.f32 %v393, %v401
      %v403 = vsub.f32 -2.0794413, %v402
      %v404 = vadd.f32 %v388, %v403
      %v405 = vmul.f32 %v403, 0.001
      %v406 = vadd.f32 %v366, %v405
      %v407 = vsel %vm110, %v404, -inf
      %v408 = vrot.slane %v407, 4
      %v409 = vmax.f32 %v407, %v408
      %v410 = vrot.slane %v409, 2
      %v411 = vmax.f32 %v409, %v410
      %v412 = vrot.slane %v411, 1
      %v413 = vmax.f32 %v411, %v412
      %v414 = vsub.f32 %v404, %v413
      %v415 = vmul.f32 %v414, 1.442695
      %v416 = vpow.pop %v415
      %v417 = vsel %vm110, %v416, 0.0
      %v418 = vrot.slane %v417, 4
      %v419 = vadd.f32 %v417, %v418
      %v420 = vrot.slane %v419, 2
      %v421 = vadd.f32 %v419, %v420
      %v422 = vrot.slane %v421, 1
      %v423 = vadd.f32 %v421, %v422
      %v424 = vlog2.pop %v423
      %v425 = vmul.f32 %v424, 0.6931472
      %v426 = vadd.f32 %v413, %v425
      %v427 = vsub.f32 -2.0794413, %v426
      %v428 = vadd.f32 %v404, %v427
      %v429 = vmul.f32 %v427, 0.001
      %v430 = vadd.f32 %v390, %v429
      %v431 = vsel %vm110, %v428, -inf
      %432 = vmax.xlane.f32.xlu0 %v431
      %v433 = vpop.xlane.xlu0 %432
      %v434 = vsub.f32 %v428, %v433
      %v435 = vmul.f32 %v434, 1.442695
      %v436 = vpow.pop %v435
      %v437 = vsel %vm110, %v436, 0.0
      %438 = vadd.xlane.f32.xlu0 %v437
      %v439 = vpop.xlane.xlu0 %438
      %v440 = vlog2.pop %v439
      %v441 = vmul.f32 %v440, 0.6931472
      %v442 = vadd.f32 %v433, %v441
      %v443 = vsub.f32 -2.0794413, %v442
      %v444 = vadd.f32 %v428, %v443
      %v445 = vmul.f32 %v443, 0.001
      %v446 = vadd.f32 %v406, %v445
      %v447 = vsel %vm110, %v444, -inf
      %v448 = vrot.slane %v447, 4
      %v449 = vmax.f32 %v447, %v448
      %v450 = vrot.slane %v449, 2
      %v451 = vmax.f32 %v449, %v450
      %v452 = vrot.slane %v451, 1
      %v453 = vmax.f32 %v451, %v452
      %v454 = vsub.f32 %v444, %v453
      %v455 = vmul.f32 %v454, 1.442695
      %v456 = vpow.pop %v455
      %v457 = vsel %vm110, %v456, 0.0
      %v458 = vrot.slane %v457, 4
      %v459 = vadd.f32 %v457, %v458
      %v460 = vrot.slane %v459, 2
      %v461 = vadd.f32 %v459, %v460
      %v462 = vrot.slane %v461, 1
      %v463 = vadd.f32 %v461, %v462
      %v464 = vlog2.pop %v463
      %v465 = vmul.f32 %v464, 0.6931472
      %v466 = vadd.f32 %v453, %v465
      %v467 = vsub.f32 -2.0794413, %v466
      %v468 = vadd.f32 %v444, %v467
      %v469 = vmul.f32 %v467, 0.001
      %v470 = vadd.f32 %v430, %v469
      %v471 = vsel %vm110, %v468, -inf
      %472 = vmax.xlane.f32.xlu0 %v471
      %v473 = vpop.xlane.xlu0 %472
      %v474 = vsub.f32 %v468, %v473
      %v475 = vmul.f32 %v474, 1.442695
      %v476 = vpow.pop %v475
      %v477 = vsel %vm110, %v476, 0.0
      %478 = vadd.xlane.f32.xlu0 %v477
      %v479 = vpop.xlane.xlu0 %478
      %v480 = vlog2.pop %v479
      %v481 = vmul.f32 %v480, 0.6931472
      %v482 = vadd.f32 %v473, %v481
      %v483 = vsub.f32 -2.0794413, %v482
      %v484 = vadd.f32 %v468, %v483
      %v485 = vmul.f32 %v483, 0.001
      %v486 = vadd.f32 %v446, %v485
      %v487 = vsel %vm110, %v484, -inf
      %v488 = vrot.slane %v487, 4
      %v489 = vmax.f32 %v487, %v488
      %v490 = vrot.slane %v489, 2
      %v491 = vmax.f32 %v489, %v490
      %v492 = vrot.slane %v491, 1
      %v493 = vmax.f32 %v491, %v492
      %v494 = vsub.f32 %v484, %v493
      %v495 = vmul.f32 %v494, 1.442695
      %v496 = vpow.pop %v495
      %v497 = vsel %vm110, %v496, 0.0
      %v498 = vrot.slane %v497, 4
      %v499 = vadd.f32 %v497, %v498
      %v500 = vrot.slane %v499, 2
      %v501 = vadd.f32 %v499, %v500
      %v502 = vrot.slane %v501, 1
      %v503 = vadd.f32 %v501, %v502
      %v504 = vlog2.pop %v503
      %v505 = vmul.f32 %v504, 0.6931472
      %v506 = vadd.f32 %v493, %v505
      %v507 = vsub.f32 -2.0794413, %v506
      %v508 = vadd.f32 %v484, %v507
      %v509 = vmul.f32 %v507, 0.001
      %v510 = vadd.f32 %v470, %v509
      %v511 = vand.u32 2147483647, %v483
      %vm512 = vcmask 7168
      %v513 = vsel %vm512, %v511, 0.0
      %514 = vadd.xlane.f32.xlu0 %v513
      %v515 = vpop.xlane.xlu0 %514
      %v516 = vrot.slane %v515, 4
      %v517 = vadd.f32 %v515, %v516
      %v518 = vrot.slane %v517, 2
      %v519 = vadd.f32 %v517, %v518
      %v520 = vrot.slane %v519, 1
      %v521 = vadd.f32 %v519, %v520
      %s522 = vtos %v521
      %s523 = smul.f32 %s522, 0.001
      %s524 = sadd.s32 %s95, 1
    $region14: #{tpu_custom_call.1} parent=1 // loop_footer
      _
    $region15: #{tpu_custom_call.1} parent=1 // loop_footer_branch
      %94 = sbr.rel target = $region11
    $region16: #{tpu_custom_call.1} parent=1 // loop_exit
      _
    %v525 = vmul.f32 %v98, 1.442695
    %v526 = vpow.pop %v525
    %v527 = vmul.f32 %v526, %v93
    %vm528 = vcmask 64512
    %v529 = vsel %vm528, %v527, 0.0
    %530 = vadd.xlane.f32.xlu0 %v529
    %v531 = vpop.xlane.xlu0 %530
    %v532 = vrot.slane %v531, 4
    %v533 = vadd.f32 %v531, %v532
    %v534 = vrot.slane %v533, 2
    %v535 = vadd.f32 %v533, %v534
    %v536 = vrot.slane %v535, 1
    %v537 = vadd.f32 %v535, %v536
    %s538 = vtos %v537
    %v539 = vstv %s538
    %vm540 = vcmask 0
    %541 = vst.msk [vmem:[#allocation5] sm:$0x1] %vm540, %v539
    %542 = vst.msk [vmem:[#allocation6] sm:$0xff] %vm528, %v526
    %543 = vst.msk [vmem:[#allocation8] sm:$0xff] %vm528, %v93
    // Predicated region
    $region17: #{tpu_custom_call.1} parent=1 // pred_check
      _
    $region18: #{tpu_custom_call.1} parent=1 // pred_check_branch
      %545 = sbr.rel (0) target = $region20
    $region19: #{tpu_custom_call.1} parent=1 // pred_region
      %547 = vsyncadd [#allocation4], 0
      %s549 = sshll.u32 [#allocation5], 4
      %s550 = int_to_ptr.vmem [resolvable:$true] %s549
      %s551 = sshll.u32 %s1, 4
      %s552 = int_to_ptr.hbm [resolvable:$true] %s551
      %554 = dma.vmem_to_hbm [thread:$0]  %s550, 16, %s552, [#allocation4]
    $region20: #{tpu_custom_call.1} parent=1 // pred_fallthru
      _
    // Predicated region
    $region21: #{tpu_custom_call.1} parent=1 // pred_check
      _
    $region22: #{tpu_custom_call.1} parent=1 // pred_check_branch
      %556 = sbr.rel (0) target = $region24
    $region23: #{tpu_custom_call.1} parent=1 // pred_region
      %558 = vsyncadd [#allocation7], 0
      %s560 = sshll.u32 [#allocation6], 4
      %s561 = int_to_ptr.vmem [resolvable:$true] %s560
      %s562 = sshll.u32 %s2, 4
      %s563 = int_to_ptr.hbm [resolvable:$true] %s562
      %565 = dma.vmem_to_hbm [thread:$0]  %s561, 128, %s563, [#allocation7]
    $region24: #{tpu_custom_call.1} parent=1 // pred_fallthru
      _
    // Predicated region
    $region25: #{tpu_custom_call.1} parent=1 // pred_check
      _
    $region26: #{tpu_custom_call.1} parent=1 // pred_check_branch
      %567 = sbr.rel (0) target = $region28
    $region27: #{tpu_custom_call.1} parent=1 // pred_region
      %569 = vsyncadd [#allocation7], 0
      %s571 = sshll.u32 [#allocation8], 4
      %s572 = int_to_ptr.vmem [resolvable:$true] %s571
      %s573 = sshll.u32 %s3, 4
      %s574 = int_to_ptr.hbm [resolvable:$true] %s573
      %576 = dma.vmem_to_hbm [thread:$0]  %s572, 128, %s574, [#allocation7]
    $region28: #{tpu_custom_call.1} parent=1 // pred_fallthru
      _
    // Predicated region
    $region29: #{tpu_custom_call.1} parent=1 // pred_check
      _
    $region30: #{tpu_custom_call.1} parent=1 // pred_check_branch
      %578 = sbr.rel (0) target = $region32
    $region31: #{tpu_custom_call.1} parent=1 // pred_region
      %580 = dma.done [#allocation4], 16
    $region32: #{tpu_custom_call.1} parent=1 // pred_fallthru
      _
    // Predicated region
    $region33: #{tpu_custom_call.1} parent=1 // pred_check
      _
    $region34: #{tpu_custom_call.1} parent=1 // pred_check_branch
      %582 = sbr.rel (0) target = $region36
    $region35: #{tpu_custom_call.1} parent=1 // pred_region
      %584 = dma.done [#allocation7], 128
    $region36: #{tpu_custom_call.1} parent=1 // pred_fallthru
      _
    // Predicated region
    $region37: #{tpu_custom_call.1} parent=1 // pred_check
      _
    $region38: #{tpu_custom_call.1} parent=1 // pred_check_branch
      %586 = sbr.rel (0) target = $region40
    $region39: #{tpu_custom_call.1} parent=1 // pred_region
      %588 = dma.done [#allocation7], 128
    $region40: #{tpu_custom_call.1} parent=1 // pred_fallthru
      _
    %589 = vsyncpa [#allocation3], 1
    %590 = vsyncpa [#allocation4], 1
    %591 = vsyncpa [#allocation7], 1

</llo_original>
